<compile_context>
chip_gen: v7x
topology: tpu7x:2x2x1
jax: 0.10.0
libtpu: 0.0.40
codegen_flags: <defaults>
</compile_context>

<pallas_src>
import jax
import jax.numpy as jnp
from jax.experimental import pallas as pl
from jax.experimental.pallas import tpu as pltpu


def _se_kernel(x_ref, w1_ref, b1_ref, w2_ref, b2_ref, o_ref):
    # x_ref block: (NB, C, HW) — C on sublanes, HW on lanes.
    x = x_ref[...]                                        # native dtype, no copy
    hw = x.shape[-1]

    # Global average pool over spatial positions (lane-axis reduction, f32 acc).
    mean = jnp.sum(x, axis=-1, dtype=jnp.float32) * (1.0 / hw)      # (NB, C)

    # fc1 (1x1 conv == channel matmul) + SiLU, in f32.
    s = jnp.dot(mean, w1_ref[...],
                preferred_element_type=jnp.float32) + b1_ref[...]   # (NB, Csq)
    s = s * jax.nn.sigmoid(s)                                       # SiLU

    # fc2 (1x1 conv) + Sigmoid, in f32.
    s2 = jnp.dot(s, w2_ref[...],
                 preferred_element_type=jnp.float32) + b2_ref[...]  # (NB, C)
    scale = jax.nn.sigmoid(s2)                                      # (NB, C)

    # Broadcast (NB, C) scale over the HW lane axis; multiply in x's dtype
    # (no full-tile f32 upcast).  Store is lane-dense when HW % 128 == 0,
    # masked-tail otherwise (acceptable; those layers are small).
    o_ref[...] = (x * scale.astype(x.dtype)[:, :, None]).astype(o_ref.dtype)


def _round_up(v, m):
    return (v + m - 1) // m * m


def _tpu_generation():
    """Returns (target block bytes, number of TensorCores sharing the grid)."""
    try:
        kind = jax.devices()[0].device_kind.lower()
    except Exception:
        kind = ""
    if ("v5 lite" in kind) or ("v5e" in kind) or ("v5lite" in kind):
        return 3 << 20, 1   # 16 MiB scoped-VMEM default -> ~13 MiB resident
    if "v6" in kind:
        return 4 << 20, 1   # 32 MiB scoped default -> ~17 MiB resident
    if ("v7" in kind) or ("tpu7" in kind):
        return 4 << 20, 2   # 32 MiB scoped default, 2 TCs per chip
    return 2 << 20, 1       # unknown backend: conservative


def _choose_block_batch(N, C, HW, itemsize, target_bytes, num_tc):
    """Pick how many batch elements to pack per grid step.

    Uses the *padded* VMEM footprint (HW padded to 128 lanes, C padded to the
    dtype's sublane tile) so non-128-multiple spatial sizes don't overshoot
    VMEM.  On multi-TC chips keeps >= ~3 steps per core when N permits so the
    pipeline can overlap DMA and compute.  Result always divides N.
    """
    sublane = 8 * max(1, 4 // itemsize)          # 8 f32 / 16 bf16 / 32 int8
    per = max(1, _round_up(C, sublane) * _round_up(HW, 128) * itemsize)
    nb = max(1, min(N, target_bytes // per))
    if num_tc >= 2 and N >= 2:
        desired_steps = min(N, 3 * num_tc)       # ~3 steps per TensorCore
        nb = min(nb, max(1, N // desired_steps))
    while N % nb:
        nb -= 1
    return nb


def squeeze_excitation(x_nchw, w1, b1, w2, b2, *, block_batch=None):
    """x_nchw: (N, C, H, W).  w1: (C, Csq), b1: (1, Csq),
    w2: (Csq, C), b2: (1, C).  Returns (N, C, H, W).

    Wrapper contract: biases pre-reshaped to 2D and conv weights pre-transposed
    from the PyTorch (out, in, 1, 1) layout to (in, out)."""
    N, C, H, W = x_nchw.shape
    Csq = w1.shape[1]
    HW = H * W

    # Contiguous reshape only — NO transpose, no extra HBM pass.
    x = x_nchw.reshape(N, C, HW)

    target_bytes, num_tc = _tpu_generation()
    itemsize = jnp.dtype(x.dtype).itemsize
    nb = block_batch if block_batch is not None else _choose_block_batch(
        N, C, HW, itemsize, target_bytes, num_tc)
    grid = (N // nb,)

    # Advisory cost: dominated by 1 read + 1 write of x.
    cost = pl.CostEstimate(
        flops=int(2 * N * C * HW + N * C + 4 * N * C * Csq + N * (C + 2 * Csq)),
        transcendentals=int(N * (C + Csq)),
        bytes_accessed=int(2 * x.size * itemsize
                           + w1.size * jnp.dtype(w1.dtype).itemsize
                           + b1.size * jnp.dtype(b1.dtype).itemsize
                           + w2.size * jnp.dtype(w2.dtype).itemsize
                           + b2.size * jnp.dtype(b2.dtype).itemsize),
    )

    out = pl.pallas_call(
        _se_kernel,
        out_shape=jax.ShapeDtypeStruct((N, C, HW), x.dtype),
        grid_spec=pltpu.PrefetchScalarGridSpec(
            num_scalar_prefetch=0,
            grid=grid,
            in_specs=[
                pl.BlockSpec((nb, C, HW), lambda b: (b, 0, 0)),
                pl.BlockSpec((C, Csq), lambda b: (0, 0)),
                pl.BlockSpec((1, Csq), lambda b: (0, 0)),
                pl.BlockSpec((Csq, C), lambda b: (0, 0)),
                pl.BlockSpec((1, C), lambda b: (0, 0)),
            ],
            out_specs=pl.BlockSpec((nb, C, HW), lambda b: (b, 0, 0)),
        ),
        # Write the scaled result back into x's buffer: SE fully consumes x and
        # each grid block reads its slab before writing it back.
        input_output_aliases={0: 0},
        compiler_params=pltpu.CompilerParams(
            dimension_semantics=("parallel",)),
        cost_estimate=cost,
    )(x, w1, b1, w2, b2)

    # Free reshape back to NCHW.
    return out.reshape(N, C, H, W)


def _reference(x_nchw, w1, b1, w2, b2):
    # Pure-JAX reference mirroring the PyTorch forward.
    mean = jnp.mean(x_nchw, axis=(2, 3))                   # (N, C)
    s = mean @ w1 + b1                                     # (N, Csq)
    s = s * jax.nn.sigmoid(s)
    s2 = s @ w2 + b2                                       # (N, C)
    scale = jax.nn.sigmoid(s2)
    return x_nchw * scale[:, :, None, None]


if __name__ == "__main__":
    # Module config: input_c = expand_c = 16, squeeze_factor = 4 -> squeeze_c = 4
    input_c = 16
    expand_c = 16
    squeeze_factor = 4
    squeeze_c = input_c // squeeze_factor

    N, H, W = 2, 16, 16

    key = jax.random.PRNGKey(0)
    kx, k1, kb1, k2, kb2 = jax.random.split(key, 5)

    x = jax.random.normal(kx, (N, expand_c, H, W), dtype=jnp.float32)

    # PyTorch fc1 weight is (squeeze_c, expand_c, 1, 1); stored pre-transposed
    # as (expand_c, squeeze_c) so the kernel does mean @ w1.  Likewise fc2.
    w1 = 0.1 * jax.random.normal(k1, (expand_c, squeeze_c), dtype=jnp.float32)
    b1 = 0.1 * jax.random.normal(kb1, (1, squeeze_c), dtype=jnp.float32)
    w2 = 0.1 * jax.random.normal(k2, (squeeze_c, expand_c), dtype=jnp.float32)
    b2 = 0.1 * jax.random.normal(kb2, (1, expand_c), dtype=jnp.float32)

    # Compute the reference before the kernel call (the kernel declares an
    # output alias onto x's buffer; XLA copy-protects live inputs, but this
    # keeps the check unambiguous).
    ref = _reference(x, w1, b1, w2, b2)

    out = squeeze_excitation(x, w1, b1, w2, b2)
    out = jax.block_until_ready(out)

    assert out.shape == x.shape
    assert jnp.allclose(out, ref, atol=1e-5, rtol=1e-5), "mismatch vs reference"

    print("KERNEL_OK")
</pallas_src>

<mosaic_0001>
module attributes {stable_mosaic.version = 11 : i64} {
  func.func @_se_kernel(%arg0: i32, %arg1: memref<2x16x256xf32, #tpu.memory_space<vmem>>, %arg2: memref<16x4xf32, #tpu.memory_space<vmem>>, %arg3: memref<1x4xf32, #tpu.memory_space<vmem>>, %arg4: memref<4x16xf32, #tpu.memory_space<vmem>>, %arg5: memref<1x16xf32, #tpu.memory_space<vmem>>, %arg6: memref<2x16x256xf32, #tpu.memory_space<vmem>>) attributes {dimension_semantics = [#tpu.dimension_semantics<parallel>], iteration_bounds = array<i64: 1>, scalar_prefetch = 0 : i64, scratch_operands = 0 : i64, tpu.core_type = #tpu.core_type<tc>, window_params = [{transform_indices = @transform_0, window_bounds = array<i64: 2, 16, 256>}, {pipeline_mode = #tpu.pipeline_mode<synchronous>, transform_indices = @transform_1, window_bounds = array<i64: 16, 4>}, {pipeline_mode = #tpu.pipeline_mode<synchronous>, transform_indices = @transform_2, window_bounds = array<i64: 1, 4>}, {pipeline_mode = #tpu.pipeline_mode<synchronous>, transform_indices = @transform_3, window_bounds = array<i64: 4, 16>}, {pipeline_mode = #tpu.pipeline_mode<synchronous>, transform_indices = @transform_4, window_bounds = array<i64: 1, 16>}, {transform_indices = @transform_5, window_bounds = array<i64: 2, 16, 256>}]} {
    %c0 = arith.constant 0 : index
    %c0_0 = arith.constant 0 : index
    %c0_1 = arith.constant 0 : index
    %0 = vector.load %arg1[%c0, %c0_0, %c0_1] : memref<2x16x256xf32, #tpu.memory_space<vmem>>, vector<2x16x256xf32>
    %cst = arith.constant dense<0.000000e+00> : vector<2x16xf32>
    %1 = vector.multi_reduction <add>, %0, %cst [2] : vector<2x16x256xf32> to vector<2x16xf32>
    %cst_2 = arith.constant 3.906250e-03 : f32
    %2 = vector.broadcast %cst_2 : f32 to vector<2x16xf32>
    %3 = arith.mulf %1, %2 : vector<2x16xf32>
    %c0_3 = arith.constant 0 : index
    %c0_4 = arith.constant 0 : index
    %4 = vector.load %arg2[%c0_3, %c0_4] : memref<16x4xf32, #tpu.memory_space<vmem>>, vector<16x4xf32>
    %cst_5 = arith.constant dense<0.000000e+00> : vector<2x4xf32>
    %5 = tpu.matmul %3, %4, %cst_5 {dimension_numbers = #tpu.dot_dimension_numbers<[1], [0], [0], [1], [0, 0, 1, 1], [], []>} : vector<2x16xf32>, vector<16x4xf32>, vector<2x4xf32> -> vector<2x4xf32>
    %c0_6 = arith.constant 0 : index
    %c0_7 = arith.constant 0 : index
    %6 = vector.load %arg3[%c0_6, %c0_7] : memref<1x4xf32, #tpu.memory_space<vmem>>, vector<1x4xf32>
    %7 = vector.broadcast %6 : vector<1x4xf32> to vector<2x4xf32>
    %8 = arith.addf %5, %7 : vector<2x4xf32>
    %9 = arith.negf %8 : vector<2x4xf32>
    %10 = math.exp %9 : vector<2x4xf32>
    %cst_8 = arith.constant 1.000000e+00 : f32
    %11 = vector.broadcast %cst_8 : f32 to vector<2x4xf32>
    %12 = arith.addf %11, %10 : vector<2x4xf32>
    %13 = arith.divf %11, %12 : vector<2x4xf32>
    %14 = arith.mulf %8, %13 : vector<2x4xf32>
    %c0_9 = arith.constant 0 : index
    %c0_10 = arith.constant 0 : index
    %15 = vector.load %arg4[%c0_9, %c0_10] : memref<4x16xf32, #tpu.memory_space<vmem>>, vector<4x16xf32>
    %cst_11 = arith.constant dense<0.000000e+00> : vector<2x16xf32>
    %16 = tpu.matmul %14, %15, %cst_11 {dimension_numbers = #tpu.dot_dimension_numbers<[1], [0], [0], [1], [0, 0, 1, 1], [], []>} : vector<2x4xf32>, vector<4x16xf32>, vector<2x16xf32> -> vector<2x16xf32>
    %c0_12 = arith.constant 0 : index
    %c0_13 = arith.constant 0 : index
    %17 = vector.load %arg5[%c0_12, %c0_13] : memref<1x16xf32, #tpu.memory_space<vmem>>, vector<1x16xf32>
    %18 = vector.broadcast %17 : vector<1x16xf32> to vector<2x16xf32>
    %19 = arith.addf %16, %18 : vector<2x16xf32>
    %20 = arith.negf %19 : vector<2x16xf32>
    %21 = math.exp %20 : vector<2x16xf32>
    %cst_14 = arith.constant 1.000000e+00 : f32
    %22 = vector.broadcast %cst_14 : f32 to vector<2x16xf32>
    %23 = arith.addf %22, %21 : vector<2x16xf32>
    %24 = arith.divf %22, %23 : vector<2x16xf32>
    %25 = vector.shape_cast %24 : vector<2x16xf32> to vector<2x16x1xf32>
    %26 = vector.broadcast %25 : vector<2x16x1xf32> to vector<2x16x256xf32>
    %27 = arith.mulf %0, %26 : vector<2x16x256xf32>
    %c0_15 = arith.constant 0 : index
    %c0_16 = arith.constant 0 : index
    %c0_17 = arith.constant 0 : index
    %28 = vector.load %arg6[%c0_15, %c0_16, %c0_17] : memref<2x16x256xf32, #tpu.memory_space<vmem>>, vector<2x16x256xf32>
    tpu.vector_store %arg6[%c0_15, %c0_16, %c0_17], %27 {strides = array<i32>} : memref<2x16x256xf32, #tpu.memory_space<vmem>>, vector<2x16x256xf32>,
    return
  }
  func.func @transform_0(%arg0: i32) -> (i32, i32, i32) {
    %c0_i32 = arith.constant 0 : i32
    %c0_i32_0 = arith.constant 0 : i32
    %c0_i32_1 = arith.constant 0 : i32
    return %arg0, %c0_i32, %c0_i32_0 : i32, i32, i32
  }
  func.func @transform_1(%arg0: i32) -> (i32, i32) {
    %c0_i32 = arith.constant 0 : i32
    %c0_i32_0 = arith.constant 0 : i32
    %c0_i32_1 = arith.constant 0 : i32
    return %c0_i32, %c0_i32_0 : i32, i32
  }
  func.func @transform_2(%arg0: i32) -> (i32, i32) {
    %c0_i32 = arith.constant 0 : i32
    %c0_i32_0 = arith.constant 0 : i32
    %c0_i32_1 = arith.constant 0 : i32
    return %c0_i32, %c0_i32_0 : i32, i32
  }
  func.func @transform_3(%arg0: i32) -> (i32, i32) {
    %c0_i32 = arith.constant 0 : i32
    %c0_i32_0 = arith.constant 0 : i32
    %c0_i32_1 = arith.constant 0 : i32
    return %c0_i32, %c0_i32_0 : i32, i32
  }
  func.func @transform_4(%arg0: i32) -> (i32, i32) {
    %c0_i32 = arith.constant 0 : i32
    %c0_i32_0 = arith.constant 0 : i32
    %c0_i32_1 = arith.constant 0 : i32
    return %c0_i32, %c0_i32_0 : i32, i32
  }
  func.func @transform_5(%arg0: i32) -> (i32, i32, i32) {
    %c0_i32 = arith.constant 0 : i32
    %c0_i32_0 = arith.constant 0 : i32
    %c0_i32_1 = arith.constant 0 : i32
    return %arg0, %c0_i32, %c0_i32_0 : i32, i32, i32
  }
}

</mosaic_0001>

<llo_original>
// kernel: tpu_custom_call.1
$region0: #{tpu_custom_call.1}
  #allocation0 [shape = 'u32[]', space=smem, size = 0x4, offset = 0x4, fixed_abs, tag = 'smem constant byte address 0x4 - core index']
  #allocation1 [shape = 'u32[144,128]{1,0:T(1,128)}', space=vmem, size = 0x12000, scoped, tag = 'internal scratch']
  %s0 = inlined_call_operand.hbm [shape: f32[2,16,256], index: 0, kind: input, shape index: {}, may-alias: {0,5}]
  %s1 = inlined_call_operand.vmem [shape: f32[16,4], index: 1, kind: input, shape index: {}]
  %s2 = inlined_call_operand.vmem [shape: f32[1,4], index: 2, kind: input, shape index: {}]
  %s3 = inlined_call_operand.vmem [shape: f32[4,16], index: 3, kind: input, shape index: {}]
  %s4 = inlined_call_operand.vmem [shape: f32[1,16], index: 4, kind: input, shape index: {}]
  %s5 = inlined_call_operand.hbm [shape: f32[2,16,256], index: 5, kind: output, shape index: {}, may-alias: {0,5}]
  %s6 = sld [smem:[#allocation0]]
  $region34: #{tpu_custom_call.1} parent=0
    _
  %s8 = ssub.s32 1, %s6
  %s9 = scalar_select 0, %s8, %s6
  $region1: #{tpu_custom_call.1} parent=0
    #allocation2 [shape = 'u8[32768]{0}', space=vmem, size = 0x8000, scoped, tag = 'input window, operand 0, single buffered']
    #allocation3 [shape = 's32[1]{0}', space=sflag, size = 0x4, scoped, tag = 'scoped memory for tpu_custom_call.1']
    #allocation4 [shape = 's32[1]{0}', space=sflag, size = 0x4, scoped, tag = 'scoped memory for tpu_custom_call.1']
    #allocation5 [shape = 'u8[32768]{0}', space=vmem, size = 0x8000, scoped, tag = 'output window, operand 0, single buffered']
    %10 = vsyncpa [#allocation3], 0
    %11 = vsyncpa [#allocation4], 0
    // Predicated region
    $region2: #{tpu_custom_call.1} parent=1 // pred_check
      _
    $region3: #{tpu_custom_call.1} parent=1 // pred_check_branch
      %13 = sbr.rel (0) target = $region5
    $region4: #{tpu_custom_call.1} parent=1 // pred_region
      %s15 = ssub.s32 1024, 1024
      %16 = vsyncadd [#allocation3], %s15
      %s17 = sshll.u32 [#allocation2], 4
      %s18 = int_to_ptr.vmem [resolvable:$true] %s17
      %23 = dma.hbm_to_vmem [thread:$0]  %s0, 1024, %s18, [#allocation3], 256, 256, 16
    $region5: #{tpu_custom_call.1} parent=1 // pred_fallthru
      _
    // Predicated region
    $region6: #{tpu_custom_call.1} parent=1 // pred_check
      _
    $region7: #{tpu_custom_call.1} parent=1 // pred_check_branch
      %25 = sbr.rel (0) target = $region9
    $region8: #{tpu_custom_call.1} parent=1 // pred_region
      _
    $region9: #{tpu_custom_call.1} parent=1 // pred_fallthru
      _
    // Predicated region
    $region10: #{tpu_custom_call.1} parent=1 // pred_check
      _
    $region11: #{tpu_custom_call.1} parent=1 // pred_check_branch
      %27 = sbr.rel (0) target = $region13
    $region12: #{tpu_custom_call.1} parent=1 // pred_region
      _
    $region13: #{tpu_custom_call.1} parent=1 // pred_fallthru
      _
    // Predicated region
    $region14: #{tpu_custom_call.1} parent=1 // pred_check
      _
    $region15: #{tpu_custom_call.1} parent=1 // pred_check_branch
      %29 = sbr.rel (0) target = $region17
    $region16: #{tpu_custom_call.1} parent=1 // pred_region
      _
    $region17: #{tpu_custom_call.1} parent=1 // pred_fallthru
      _
    // Predicated region
    $region18: #{tpu_custom_call.1} parent=1 // pred_check
      _
    $region19: #{tpu_custom_call.1} parent=1 // pred_check_branch
      %31 = sbr.rel (0) target = $region21
    $region20: #{tpu_custom_call.1} parent=1 // pred_region
      _
    $region21: #{tpu_custom_call.1} parent=1 // pred_fallthru
      _
    // Predicated region
    $region22: #{tpu_custom_call.1} parent=1 // pred_check
      _
    $region23: #{tpu_custom_call.1} parent=1 // pred_check_branch
      %33 = sbr.rel (0) target = $region25
    $region24: #{tpu_custom_call.1} parent=1 // pred_region
      %34 = dma.done [#allocation3], 1024
    $region25: #{tpu_custom_call.1} parent=1 // pred_fallthru
      _
    %v35 = vld [vmem:[#allocation2] sm:$0xff]
    %v36 = vld [vmem:[#allocation2 + $0x8] sm:$0xff]
    %v37 = vld [vmem:[#allocation2 + $0x10] sm:$0xff]
    %v38 = vld [vmem:[#allocation2 + $0x18] sm:$0xff]
    %v39 = vld [vmem:[#allocation2 + $0x20] sm:$0xff]
    %v40 = vld [vmem:[#allocation2 + $0x28] sm:$0xff]
    %v41 = vld [vmem:[#allocation2 + $0x30] sm:$0xff]
    %v42 = vld [vmem:[#allocation2 + $0x38] sm:$0xff]
    %v43 = vadd.f32 %v35, %v36
    %44 = vadd.xlane.f32.xlu0 %v43
    %v45 = vpop.xlane.xlu0 %44
    %v46 = vadd.f32 %v37, %v38
    %47 = vadd.xlane.f32.xlu0 %v46
    %v48 = vpop.xlane.xlu0 %47
    %v49 = vadd.f32 %v39, %v40
    %50 = vadd.xlane.f32.xlu0 %v49
    %v51 = vpop.xlane.xlu0 %50
    %v52 = vadd.f32 %v41, %v42
    %53 = vadd.xlane.f32.xlu0 %v52
    %v54 = vpop.xlane.xlu0 %53
    %v55 = vmul.f32 %v45, 0.00390625
    %v56 = vmul.f32 %v48, 0.00390625
    %v57 = vmul.f32 %v51, 0.00390625
    %v58 = vmul.f32 %v54, 0.00390625
    %v59 = vld [vmem:[%s1] sm:$0xff]
    %v60 = vld [vmem:[%s1 + $0x8] sm:$0xff]
    %v61 = vld [vmem:[%s2] sm:$0x1]
    %v63 = vlaneseq
    %v64 = vshrl.u32 %v63, 7
    %v65 = vsub.s32 0, %v64
    %v66 = vrot.slane %v61, %v65
    %v72 = vlaneseq
    %v73 = vand.u32 %v72, 127
    %v74 = vlaneseq
    %v75 = vshrl.u32 %v74, 7
    %v76 = vsub.s32 %v73, %v75
    %v77 = vrot.slane %v55, %v76
    %v78 = vadd.s32 %v73, 4294967288
    %v79 = vlaneseq
    %v80 = vshrl.u32 %v79, 7
    %v81 = vsub.s32 %v78, %v80
    %v82 = vrot.slane %v56, %v81
    %vm83 = vcmask 130112
    %v84 = vsel %vm83, %v82, %v77
    %v85 = vlaneseq
    %v86 = vshrl.u32 %v85, 7
    %v87 = vsub.s32 %v73, %v86
    %v88 = vrot.slane %v57, %v87
    %v89 = vlaneseq
    %v90 = vshrl.u32 %v89, 7
    %v91 = vsub.s32 %v78, %v90
    %v92 = vrot.slane %v58, %v91
    %v93 = vsel %vm83, %v92, %v88
    %vm94 = vcmask 1041409
    %v95 = vsel %vm94, %v93, %v84
    %vm96 = vcmask 130048
    %v97 = vsel %vm96, %v95, 0
    %99 = vmatprep.subr.mxu0 0.0
    %100 = vmatpush1.msra.mxu0 %v59
    %101 = vmatprep.subr.mxu0 0.0
    %102 = vmatpush1.msra.mxu0 %v60
    %103 = vmatprep.subr.mxu0 0.0
    %104 = vmatpush1.msra.mxu0 0.0
    %105 = vmatprep.subr.mxu0 0.0
    %106 = vmatpush1.msra.mxu0 0.0
    %107 = vmatprep.subr.mxu0 0.0
    %108 = vmatpush1.msra.mxu0 0.0
    %109 = vmatprep.subr.mxu0 0.0
    %110 = vmatpush1.msra.mxu0 0.0
    %111 = vmatprep.subr.mxu0 0.0
    %112 = vmatpush1.msra.mxu0 0.0
    %113 = vmatprep.subr.mxu0 0.0
    %114 = vmatpush1.msra.mxu0 0.0
    %115 = vmatprep.subr.mxu0 0.0
    %116 = vmatpush1.msra.mxu0 0.0
    %117 = vmatprep.subr.mxu0 0.0
    %118 = vmatpush1.msra.mxu0 0.0
    %119 = vmatprep.subr.mxu0 0.0
    %120 = vmatpush1.msra.mxu0 0.0
    %121 = vmatprep.subr.mxu0 0.0
    %122 = vmatpush1.msra.mxu0 0.0
    %123 = vmatprep.subr.mxu0 0.0
    %124 = vmatpush1.msra.mxu0 0.0
    %125 = vmatprep.subr.mxu0 0.0
    %126 = vmatpush1.msra.mxu0 0.0
    %127 = vmatprep.subr.mxu0 0.0
    %128 = vmatpush1.msra.mxu0 0.0
    %129 = vmatprep.subr.mxu0 0.0
    %130 = vmatpush1.msra.mxu0 0.0
    %131 = vmatprep.subr.mxu0 0.0
    %132 = vmatpush1.msra.mxu0 0.0
    %133 = vmatprep.subr.mxu0 0.0
    %134 = vmatpush1.msra.mxu0 0.0
    %135 = vmatprep.subr.mxu0 0.0
    %136 = vmatpush1.msra.mxu0 0.0
    %137 = vmatprep.subr.mxu0 0.0
    %138 = vmatpush1.msra.mxu0 0.0
    %139 = vmatprep.subr.mxu0 0.0
    %140 = vmatpush1.msra.mxu0 0.0
    %141 = vmatprep.subr.mxu0 0.0
    %142 = vmatpush1.msra.mxu0 0.0
    %143 = vmatprep.subr.mxu0 0.0
    %144 = vmatpush1.msra.mxu0 0.0
    %145 = vmatprep.subr.mxu0 0.0
    %146 = vmatpush1.msra.mxu0 0.0
    %147 = vmatprep.subr.mxu0 0.0
    %148 = vmatpush1.msra.mxu0 0.0
    %149 = vmatprep.subr.mxu0 0.0
    %150 = vmatpush1.msra.mxu0 0.0
    %151 = vmatprep.subr.mxu0 0.0
    %152 = vmatpush1.msra.mxu0 0.0
    %153 = vmatprep.subr.mxu0 0.0
    %154 = vmatpush1.msra.mxu0 0.0
    %155 = vmatprep.subr.mxu0 0.0
    %156 = vmatpush1.msra.mxu0 0.0
    %157 = vmatprep.subr.mxu0 0.0
    %158 = vmatpush1.msra.mxu0 0.0
    %159 = vmatprep.subr.mxu0 0.0
    %160 = vmatpush1.msra.mxu0 0.0
    %161 = vmatprep.subr.mxu0 0.0
    %162 = vmatpush1.msra.mxu0 0.0
    %163 = vmatprep.mubr.f32.mxu0 0.0
    %164 = vmatmul.mubr.f32.gmra.mrb[0].mxu0 %v97
    %v165 = vpop.f32.mrb[0].mxu0
    %v166 = vadd.f32 %v66, %v165
    %v167 = vpop.f32.mrb[0].mxu0
    %168 = vdwg.mxu0
    %v169 = vxor.u32 %v166, 2147483648
    %v170 = vmul.f32 %v169, 1.442695
    %v171 = vpow.pop %v170
    %v172 = vadd.f32 %v171, 1.0
    %v173 = vrcp.pop %v172
    %v174 = vmul.f32 1.0, %v173
    %v175 = vmul.f32 %v166, %v174
    %v176 = vld [vmem:[%s3] sm:$0xf]
    %v177 = vld [vmem:[%s4] sm:$0x1]
    %v179 = vlaneseq
    %v180 = vshrl.u32 %v179, 7
    %v181 = vsub.s32 0, %v180
    %v182 = vrot.slane %v177, %v181
    %vm184 = vcmask 31744
    %v186 = vsel %vm184, %v175, 0
    %vm188 = vcmask 1043456
    %v190 = vsel %vm188, %v176, 0
    %192 = vmatprep.subr.mxu0 0.0
    %193 = vmatpush1.msra.mxu0 %v190
    %194 = vmatprep.subr.mxu0 0.0
    %195 = vmatpush1.msra.mxu0 0.0
    %196 = vmatprep.subr.mxu0 0.0
    %197 = vmatpush1.msra.mxu0 0.0
    %198 = vmatprep.subr.mxu0 0.0
    %199 = vmatpush1.msra.mxu0 0.0
    %200 = vmatprep.subr.mxu0 0.0
    %201 = vmatpush1.msra.mxu0 0.0
    %202 = vmatprep.subr.mxu0 0.0
    %203 = vmatpush1.msra.mxu0 0.0
    %204 = vmatprep.subr.mxu0 0.0
    %205 = vmatpush1.msra.mxu0 0.0
    %206 = vmatprep.subr.mxu0 0.0
    %207 = vmatpush1.msra.mxu0 0.0
    %208 = vmatprep.subr.mxu0 0.0
    %209 = vmatpush1.msra.mxu0 0.0
    %210 = vmatprep.subr.mxu0 0.0
    %211 = vmatpush1.msra.mxu0 0.0
    %212 = vmatprep.subr.mxu0 0.0
    %213 = vmatpush1.msra.mxu0 0.0
    %214 = vmatprep.subr.mxu0 0.0
    %215 = vmatpush1.msra.mxu0 0.0
    %216 = vmatprep.subr.mxu0 0.0
    %217 = vmatpush1.msra.mxu0 0.0
    %218 = vmatprep.subr.mxu0 0.0
    %219 = vmatpush1.msra.mxu0 0.0
    %220 = vmatprep.subr.mxu0 0.0
    %221 = vmatpush1.msra.mxu0 0.0
    %222 = vmatprep.subr.mxu0 0.0
    %223 = vmatpush1.msra.mxu0 0.0
    %224 = vmatprep.subr.mxu0 0.0
    %225 = vmatpush1.msra.mxu0 0.0
    %226 = vmatprep.subr.mxu0 0.0
    %227 = vmatpush1.msra.mxu0 0.0
    %228 = vmatprep.subr.mxu0 0.0
    %229 = vmatpush1.msra.mxu0 0.0
    %230 = vmatprep.subr.mxu0 0.0
    %231 = vmatpush1.msra.mxu0 0.0
    %232 = vmatprep.subr.mxu0 0.0
    %233 = vmatpush1.msra.mxu0 0.0
    %234 = vmatprep.subr.mxu0 0.0
    %235 = vmatpush1.msra.mxu0 0.0
    %236 = vmatprep.subr.mxu0 0.0
    %237 = vmatpush1.msra.mxu0 0.0
    %238 = vmatprep.subr.mxu0 0.0
    %239 = vmatpush1.msra.mxu0 0.0
    %240 = vmatprep.subr.mxu0 0.0
    %241 = vmatpush1.msra.mxu0 0.0
    %242 = vmatprep.subr.mxu0 0.0
    %243 = vmatpush1.msra.mxu0 0.0
    %244 = vmatprep.subr.mxu0 0.0
    %245 = vmatpush1.msra.mxu0 0.0
    %246 = vmatprep.subr.mxu0 0.0
    %247 = vmatpush1.msra.mxu0 0.0
    %248 = vmatprep.subr.mxu0 0.0
    %249 = vmatpush1.msra.mxu0 0.0
    %250 = vmatprep.subr.mxu0 0.0
    %251 = vmatpush1.msra.mxu0 0.0
    %252 = vmatprep.subr.mxu0 0.0
    %253 = vmatpush1.msra.mxu0 0.0
    %254 = vmatprep.subr.mxu0 0.0
    %255 = vmatpush1.msra.mxu0 0.0
    %256 = vmatprep.mubr.f32.mxu0 0.0
    %257 = vmatmul.mubr.f32.gmra.mrb[0].mxu0 %v186
    %v258 = vpop.f32.mrb[0].mxu0
    %v259 = vadd.f32 %v182, %v258
    %v260 = vpop.f32.mrb[0].mxu0
    %261 = vdwg.mxu0
    %v262 = vxor.u32 %v259, 2147483648
    %v263 = vmul.f32 %v262, 1.442695
    %v264 = vpow.pop %v263
    %v265 = vadd.f32 %v264, 1.0
    %v266 = vrcp.pop %v265
    %v267 = vmul.f32 1.0, %v266
    %v268 = vlaneseq
    %v269 = vshrl.u32 %v268, 7
    %v270 = vsub.s32 0, %v269
    %v271 = vrot.slane %v267, %v270
    %273 = vbcast.lane.b32.xlu0 %v271, 256
    %v274 = vpop.permute.xlu0 %273
    %s276 = sor.u32 256, 8
    %277 = vbcast.lane.b32.xlu0 %v271, %s276
    %v278 = vpop.permute.xlu0 %277
    %v279 = vlaneseq
    %v280 = vshrl.u32 %v279, 7
    %v281 = vsub.s32 1, %v280
    %v282 = vrot.slane %v267, %v281
    %284 = vbcast.lane.b32.xlu0 %v282, 256
    %v285 = vpop.permute.xlu0 %284
    %s287 = sor.u32 256, 8
    %288 = vbcast.lane.b32.xlu0 %v282, %s287
    %v289 = vpop.permute.xlu0 %288
    %v290 = vmul.f32 %v35, %v274
    %v291 = vmul.f32 %v36, %v274
    %v292 = vmul.f32 %v37, %v278
    %v293 = vmul.f32 %v38, %v278
    %v294 = vmul.f32 %v39, %v285
    %v295 = vmul.f32 %v40, %v285
    %v296 = vmul.f32 %v41, %v289
    %v297 = vmul.f32 %v42, %v289
    %298 = vst [vmem:[#allocation5] sm:$0xff] %v290
    %299 = vst [vmem:[#allocation5 + $0x8] sm:$0xff] %v291
    %300 = vst [vmem:[#allocation5 + $0x10] sm:$0xff] %v292
    %301 = vst [vmem:[#allocation5 + $0x18] sm:$0xff] %v293
    %302 = vst [vmem:[#allocation5 + $0x20] sm:$0xff] %v294
    %303 = vst [vmem:[#allocation5 + $0x28] sm:$0xff] %v295
    %304 = vst [vmem:[#allocation5 + $0x30] sm:$0xff] %v296
    %305 = vst [vmem:[#allocation5 + $0x38] sm:$0xff] %v297
    // Predicated region
    $region26: #{tpu_custom_call.1} parent=1 // pred_check
      _
    $region27: #{tpu_custom_call.1} parent=1 // pred_check_branch
      %307 = sbr.rel (0) target = $region29
    $region28: #{tpu_custom_call.1} parent=1 // pred_region
      %s309 = ssub.s32 1024, 1024
      %310 = vsyncadd [#allocation4], %s309
      %s311 = sshll.u32 [#allocation5], 4
      %s312 = int_to_ptr.vmem [resolvable:$true] %s311
      %317 = dma.vmem_to_hbm [thread:$0]  %s312, 1024, %s5, [#allocation4], 256, 256, 16
    $region29: #{tpu_custom_call.1} parent=1 // pred_fallthru
      _
    // Predicated region
    $region30: #{tpu_custom_call.1} parent=1 // pred_check
      _
    $region31: #{tpu_custom_call.1} parent=1 // pred_check_branch
      %319 = sbr.rel (0) target = $region33
    $region32: #{tpu_custom_call.1} parent=1 // pred_region
      %320 = dma.done [#allocation4], 1024
    $region33: #{tpu_custom_call.1} parent=1 // pred_fallthru
      _
    %321 = vsyncpa [#allocation3], 1
    %322 = vsyncpa [#allocation4], 1

</llo_original>
